<compile_context>
chip_gen: v5e
topology: v5e:2x2
jax: 0.10.0
libtpu: 0.0.40
codegen_flags: <defaults>
</compile_context>

<pallas_src>
import functools

import jax
import jax.numpy as jnp
from jax.experimental import pallas as pl
from jax.experimental.pallas import tpu as pltpu

EPS = 0.0  # GINConv default eps (train_eps=False)


# ---------------------------------------------------------------------------
# Helpers
# ---------------------------------------------------------------------------
def _round_up(n, m):
    return ((n + m - 1) // m) * m


def _pad2(a, rows, cols):
    return jnp.pad(a, ((0, rows - a.shape[0]), (0, cols - a.shape[1])))


def _choose_tiles(n):
    """Tiles for the tiled fallback path.  Prefer large K tiles (tk); pad n to a
    multiple of tk unless the padding blow-up of A exceeds ~30%."""
    n128 = _round_up(n, 128)
    for tk in (2048, 1024, 512, 256):
        n_p = _round_up(n128, tk)
        if n_p * n_p <= 1.3 * n128 * n128:
            return n_p, 256, tk          # tk multiple of 256 => tm=256 divides n_p
    return n128, 128, 128


def build_adjacency(edge_index, num_nodes):
    """Dense A'[dst, src] = edge multiplicity, plus (1+eps) on the diagonal
    (folds the GIN self term into the aggregation matmul)."""
    src = edge_index[0]
    dst = edge_index[1]
    a = jnp.zeros((num_nodes, num_nodes), dtype=jnp.float32)
    a = a.at[dst, src].add(1.0)
    a = a + (1.0 + EPS) * jnp.eye(num_nodes, dtype=jnp.float32)
    return a


# ---------------------------------------------------------------------------
# Fused kernel: all layers in one pallas_call; A and h resident in VMEM.
# ---------------------------------------------------------------------------
def gin_fused_kernel(a_ref, x0_ref, w1_ref, b1_ref, w2_ref, b2_ref, o_ref, h_ref):
    l = pl.program_id(0)

    @pl.when(l == 0)
    def _init():
        h_ref[...] = x0_ref[...]            # bf16 activation scratch

    # Aggregation h_agg = A' @ h : native bf16 x bf16 MXU matmul, f32 accumulate.
    agg = jnp.dot(a_ref[...], h_ref[...], preferred_element_type=jnp.float32)

    # 2-layer MLP epilogue (small vs. aggregation; kept f32 for accuracy).
    h1 = jnp.maximum(
        jnp.dot(agg, w1_ref[0], preferred_element_type=jnp.float32) + b1_ref[0],
        0.0,
    )
    h2 = jnp.dot(h1, w2_ref[0], preferred_element_type=jnp.float32) + b2_ref[0]

    # Inter-layer activations stored bf16 (feeds the bf16 MXU path next layer).
    h_ref[...] = h2.astype(jnp.bfloat16)

    @pl.when(l == pl.num_programs(0) - 1)
    def _store():
        o_ref[...] = h2


def gin_fused(a_bf16, x0_bf16, w1s, b1s, w2s, b2s):
    n_p = a_bf16.shape[0]
    f_p = x0_bf16.shape[1]
    num_layers = w1s.shape[0]

    flops = num_layers * (2 * n_p * n_p * f_p + 4 * n_p * f_p * f_p)
    bytes_accessed = (
        n_p * n_p * 2                                   # A (bf16), streamed once
        + n_p * f_p * 2                                 # x0 (bf16), once
        + num_layers * (2 * f_p * f_p + 2 * f_p) * 4    # per-layer weights/biases
        + n_p * f_p * 4                                 # output
    )
    vmem_est = (
        2 * n_p * n_p * 2          # A (conservatively x2 buffers)
        + 2 * n_p * f_p * 2        # x0
        + n_p * f_p * 2            # h scratch
        + 2 * n_p * f_p * 4        # output
        + 4 * f_p * f_p * 4        # W1/W2 double-buffered
        + 8 * f_p * 4              # biases
    )
    vmem_limit = int(min(max(vmem_est + (4 << 20), 16 << 20), 36 << 20))

    return pl.pallas_call(
        gin_fused_kernel,
        out_shape=jax.ShapeDtypeStruct((n_p, f_p), jnp.float32),
        grid=(num_layers,),
        in_specs=[
            pl.BlockSpec((n_p, n_p), lambda l: (0, 0)),        # A, VMEM-resident
            pl.BlockSpec((n_p, f_p), lambda l: (0, 0)),        # x0, VMEM-resident
            pl.BlockSpec((1, f_p, f_p), lambda l: (l, 0, 0)),  # W1[l]
            pl.BlockSpec((1, 1, f_p), lambda l: (l, 0, 0)),    # b1[l]
            pl.BlockSpec((1, f_p, f_p), lambda l: (l, 0, 0)),  # W2[l]
            pl.BlockSpec((1, 1, f_p), lambda l: (l, 0, 0)),    # b2[l]
        ],
        out_specs=pl.BlockSpec((n_p, f_p), lambda l: (0, 0)),
        scratch_shapes=[pltpu.VMEM((n_p, f_p), jnp.bfloat16)],
        compiler_params=pltpu.CompilerParams(
            dimension_semantics=("arbitrary",),
            vmem_limit_bytes=vmem_limit,
        ),
        cost_estimate=pl.CostEstimate(
            flops=flops, transcendentals=0, bytes_accessed=bytes_accessed
        ),
    )(a_bf16, x0_bf16, w1s, b1s, w2s, b2s)


# ---------------------------------------------------------------------------
# Tiled fallback kernel: one layer, grid = (row tiles, K tiles); x resident.
# ---------------------------------------------------------------------------
def gin_layer_kernel(a_ref, x_ref, w1_ref, b1_ref, w2_ref, b2_ref, o_ref, acc_ref,
                     *, tk):
    k = pl.program_id(1)

    @pl.when(k == 0)
    def _init():
        acc_ref[...] = jnp.zeros_like(acc_ref)

    # x is fully VMEM-resident; slice the K stripe in-kernel (no re-stream per
    # row tile).  bf16 x bf16 MXU matmul with f32 accumulation.
    start = pl.multiple_of(k * tk, tk)
    acc_ref[...] += jnp.dot(
        a_ref[...], x_ref[pl.ds(start, tk), :], preferred_element_type=jnp.float32
    )

    @pl.when(k == pl.num_programs(1) - 1)
    def _finalize():
        h = acc_ref[...]
        h1 = jnp.maximum(
            jnp.dot(h, w1_ref[...], preferred_element_type=jnp.float32) + b1_ref[...],
            0.0,
        )
        o_ref[...] = (
            jnp.dot(h1, w2_ref[...], preferred_element_type=jnp.float32) + b2_ref[...]
        ).astype(o_ref.dtype)


def gin_layer_tiled(a, x, w1, b1, w2, b2, *, tm, tk, out_dtype):
    """a: (Np, Np) bf16 adjacency (self term folded); x: (Np, F_in_p) bf16."""
    n_p = a.shape[0]
    f_in = x.shape[1]
    d_hid = w1.shape[1]
    d_out = w2.shape[1]
    out_bytes = jnp.dtype(out_dtype).itemsize
    grid = (n_p // tm, n_p // tk)

    flops = 2 * n_p * n_p * f_in + 2 * n_p * f_in * d_hid + 2 * n_p * d_hid * d_out
    bytes_accessed = (
        n_p * n_p * 2                                           # A (bf16), once
        + n_p * f_in * 2                                        # x (bf16), once
        + (f_in * d_hid + d_hid + d_hid * d_out + d_out) * 4    # weights/biases
        + n_p * d_out * out_bytes                               # output
    )
    vmem_est = (
        2 * tm * tk * 2                                         # A tile, 2 bufs
        + 2 * n_p * f_in * 2                                    # resident x
        + 2 * (f_in * d_hid + d_hid + d_hid * d_out + d_out) * 4
        + 2 * tm * d_out * out_bytes
        + tm * f_in * 4                                         # acc scratch
    )
    vmem_limit = int(min(max(vmem_est + (4 << 20), 16 << 20), 36 << 20))

    kernel = functools.partial(gin_layer_kernel, tk=tk)
    return pl.pallas_call(
        kernel,
        out_shape=jax.ShapeDtypeStruct((n_p, d_out), out_dtype),
        grid=grid,
        in_specs=[
            pl.BlockSpec((tm, tk), lambda i, k: (i, k)),        # A tile
            pl.BlockSpec((n_p, f_in), lambda i, k: (0, 0)),     # x, VMEM-resident
            pl.BlockSpec((f_in, d_hid), lambda i, k: (0, 0)),   # W1 (full)
            pl.BlockSpec((1, d_hid), lambda i, k: (0, 0)),      # b1
            pl.BlockSpec((d_hid, d_out), lambda i, k: (0, 0)),  # W2 (full)
            pl.BlockSpec((1, d_out), lambda i, k: (0, 0)),      # b2
        ],
        out_specs=pl.BlockSpec((tm, d_out), lambda i, k: (i, 0)),
        scratch_shapes=[pltpu.VMEM((tm, f_in), jnp.float32)],
        compiler_params=pltpu.CompilerParams(
            dimension_semantics=("parallel", "arbitrary"),
            vmem_limit_bytes=vmem_limit,
        ),
        cost_estimate=pl.CostEstimate(
            flops=flops, transcendentals=0, bytes_accessed=bytes_accessed
        ),
    )(a, x, w1, b1, w2, b2)


# ---------------------------------------------------------------------------
# Parameters / forward
# ---------------------------------------------------------------------------
def init_gin_params(key, input_dim, hidden_dim, output_dim, num_layers):
    """Each layer's MLP:  Linear(d_in -> d_out), ReLU, Linear(d_out -> d_out)."""
    dims = [(input_dim, hidden_dim)]
    dims += [(hidden_dim, hidden_dim)] * (num_layers - 2)
    dims += [(hidden_dim, output_dim)]
    params = []
    for (d_in, d_out) in dims:
        key, k1, k2, k3, k4 = jax.random.split(key, 5)
        s1 = 1.0 / jnp.sqrt(d_in)
        s2 = 1.0 / jnp.sqrt(d_out)
        w1 = jax.random.uniform(k1, (d_in, d_out), jnp.float32, -s1, s1)
        b1 = jax.random.uniform(k2, (1, d_out), jnp.float32, -s1, s1)
        w2 = jax.random.uniform(k3, (d_out, d_out), jnp.float32, -s2, s2)
        b2 = jax.random.uniform(k4, (1, d_out), jnp.float32, -s2, s2)
        params.append((w1, b1, w2, b2))
    return params


@functools.partial(jax.jit, static_argnames=("force_tiled",))
def gin_forward(x, edge_index, params, force_tiled=False):
    n, f_in = x.shape
    d_out_final = params[-1][3].shape[1]

    # Common lane-dense feature width across all layers (for the fused path).
    all_dims = [f_in] + [p[0].shape[1] for p in params] + [p[2].shape[1] for p in params]
    f_p = max(_round_up(d, 128) for d in all_dims)

    n_fused = _round_up(n, 128)
    fused_vmem = (
        2 * n_fused * n_fused * 2 + 3 * n_fused * f_p * 2
        + 2 * n_fused * f_p * 4 + 4 * f_p * f_p * 4
    )
    use_fused = (not force_tiled) and fused_vmem <= (24 << 20)

    a = build_adjacency(edge_index, n)

    if use_fused:
        # Single pallas_call: A + activations VMEM-resident across all layers.
        n_p = n_fused
        a_p = _pad2(a, n_p, n_p).astype(jnp.bfloat16)
        x0 = _pad2(x.astype(jnp.float32), n_p, f_p).astype(jnp.bfloat16)
        w1s = jnp.stack([_pad2(w1, f_p, f_p) for (w1, _, _, _) in params])
        b1s = jnp.stack([_pad2(b1, 1, f_p) for (_, b1, _, _) in params])
        w2s = jnp.stack([_pad2(w2, f_p, f_p) for (_, _, w2, _) in params])
        b2s = jnp.stack([_pad2(b2, 1, f_p) for (_, _, _, b2) in params])
        out = gin_fused(a_p, x0, w1s, b1s, w2s, b2s)
        return out[:n, :d_out_final]

    # Tiled fallback: per-layer pallas_call, A streamed in large bf16 tiles.
    n_p, tm, tk = _choose_tiles(n)
    a_p = _pad2(a, n_p, n_p).astype(jnp.bfloat16)
    h = _pad2(x.astype(jnp.float32), n_p, _round_up(f_in, 128)).astype(jnp.bfloat16)
    for li, (w1, b1, w2, b2) in enumerate(params):
        d_in, d_hid = w1.shape
        d_out = w2.shape[1]
        d_in_p = _round_up(d_in, 128)
        d_hid_p = _round_up(d_hid, 128)
        d_out_p = _round_up(d_out, 128)
        w1p = _pad2(w1, d_in_p, d_hid_p)
        b1p = _pad2(b1, 1, d_hid_p)
        w2p = _pad2(w2, d_hid_p, d_out_p)
        b2p = _pad2(b2, 1, d_out_p)
        last = li == len(params) - 1
        out_dtype = jnp.float32 if last else jnp.bfloat16
        h = gin_layer_tiled(a_p, h, w1p, b1p, w2p, b2p, tm=tm, tk=tk,
                            out_dtype=out_dtype)
    return h[:n, :d_out_final]


def gin_reference(x, edge_index, params):
    """Pure-JAX f32 reference (dense aggregation), for correctness checking."""
    n = x.shape[0]
    a = build_adjacency(edge_index, n)
    h = x.astype(jnp.float32)
    for (w1, b1, w2, b2) in params:
        agg = a @ h
        h = jnp.maximum(agg @ w1 + b1, 0.0) @ w2 + b2
    return h


if __name__ == "__main__":
    N = 16          # number of nodes
    E = 32          # number of edges
    INPUT_DIM = 8
    HIDDEN_DIM = 32
    OUTPUT_DIM = 16
    NUM_LAYERS = 3

    key = jax.random.PRNGKey(0)
    kx, ke, kp = jax.random.split(key, 3)

    x = jax.random.normal(kx, (N, INPUT_DIM), dtype=jnp.float32)
    edge_index = jax.random.randint(ke, (2, E), 0, N, dtype=jnp.int32)
    params = init_gin_params(kp, INPUT_DIM, HIDDEN_DIM, OUTPUT_DIM, NUM_LAYERS)

    # Fused (layer-resident) path.
    out = jax.block_until_ready(gin_forward(x, edge_index, params))
    assert out.shape == (N, OUTPUT_DIM), out.shape
    assert out.dtype == jnp.float32, out.dtype
    assert bool(jnp.all(jnp.isfinite(out)))
    ref = gin_reference(x, edge_index, params)
    err = float(jnp.max(jnp.abs(out - ref)) / (jnp.max(jnp.abs(ref)) + 1e-6))
    assert err < 0.05, f"fused path error too large: {err}"

    # Tiled fallback path (exercised explicitly on a slightly larger graph).
    N2, E2 = 300, 1200
    kx2, ke2 = jax.random.split(ke)
    x2 = jax.random.normal(kx2, (N2, INPUT_DIM), dtype=jnp.float32)
    edge_index2 = jax.random.randint(ke2, (2, E2), 0, N2, dtype=jnp.int32)
    out2 = jax.block_until_ready(gin_forward(x2, edge_index2, params, force_tiled=True))
    assert out2.shape == (N2, OUTPUT_DIM), out2.shape
    assert out2.dtype == jnp.float32, out2.dtype
    assert bool(jnp.all(jnp.isfinite(out2)))
    ref2 = gin_reference(x2, edge_index2, params)
    err2 = float(jnp.max(jnp.abs(out2 - ref2)) / (jnp.max(jnp.abs(ref2)) + 1e-6))
    assert err2 < 0.05, f"tiled path error too large: {err2}"

    print("KERNEL_OK")
</pallas_src>

<mosaic_0001>
module attributes {stable_mosaic.version = 11 : i64} {
  func.func @gin_fused_kernel(%arg0: i32, %arg1: memref<128x128xbf16, #tpu.memory_space<vmem>>, %arg2: memref<128x128xbf16, #tpu.memory_space<vmem>>, %arg3: memref<1x128x128xf32, #tpu.memory_space<vmem>>, %arg4: memref<1x1x128xf32, #tpu.memory_space<vmem>>, %arg5: memref<1x128x128xf32, #tpu.memory_space<vmem>>, %arg6: memref<1x1x128xf32, #tpu.memory_space<vmem>>, %arg7: memref<128x128xf32, #tpu.memory_space<vmem>>, %arg8: memref<128x128xbf16, #tpu.memory_space<vmem>>) attributes {dimension_semantics = [#tpu.dimension_semantics<arbitrary>], iteration_bounds = array<i64: 3>, scalar_prefetch = 0 : i64, scratch_operands = 1 : i64, tpu.core_type = #tpu.core_type<tc>, window_params = [{pipeline_mode = #tpu.pipeline_mode<synchronous>, transform_indices = @transform_0, window_bounds = array<i64: 128, 128>}, {pipeline_mode = #tpu.pipeline_mode<synchronous>, transform_indices = @transform_1, window_bounds = array<i64: 128, 128>}, {transform_indices = @transform_2, window_bounds = array<i64: 1, 128, 128>}, {transform_indices = @transform_3, window_bounds = array<i64: 1, 1, 128>}, {transform_indices = @transform_4, window_bounds = array<i64: 1, 128, 128>}, {transform_indices = @transform_5, window_bounds = array<i64: 1, 1, 128>}, {pipeline_mode = #tpu.pipeline_mode<synchronous>, transform_indices = @transform_6, window_bounds = array<i64: 128, 128>}]} {
    %c0_i32 = arith.constant 0 : i32
    %0 = arith.cmpi eq, %arg0, %c0_i32 : i32
    %1 = arith.extui %0 : i1 to i32
    %c0_i32_0 = arith.constant 0 : i32
    %2 = arith.cmpi ne, %1, %c0_i32_0 : i32
    scf.if %2 {
      %c0_22 = arith.constant 0 : index
      %c0_23 = arith.constant 0 : index
      %27 = vector.load %arg2[%c0_22, %c0_23] : memref<128x128xbf16, #tpu.memory_space<vmem>>, vector<128x128xbf16>
      %c0_24 = arith.constant 0 : index
      %c0_25 = arith.constant 0 : index
      %28 = vector.load %arg8[%c0_24, %c0_25] : memref<128x128xbf16, #tpu.memory_space<vmem>>, vector<128x128xbf16>
      tpu.vector_store %arg8[%c0_24, %c0_25], %27 {strides = array<i32>} : memref<128x128xbf16, #tpu.memory_space<vmem>>, vector<128x128xbf16>,
    } else {
    }
    %c0 = arith.constant 0 : index
    %c0_1 = arith.constant 0 : index
    %3 = vector.load %arg1[%c0, %c0_1] : memref<128x128xbf16, #tpu.memory_space<vmem>>, vector<128x128xbf16>
    %c0_2 = arith.constant 0 : index
    %c0_3 = arith.constant 0 : index
    %4 = vector.load %arg8[%c0_2, %c0_3] : memref<128x128xbf16, #tpu.memory_space<vmem>>, vector<128x128xbf16>
    %cst = arith.constant dense<0.000000e+00> : vector<128x128xf32>
    %5 = tpu.matmul %3, %4, %cst {dimension_numbers = #tpu.dot_dimension_numbers<[1], [0], [0], [1], [0, 0, 1, 1], [], []>} : vector<128x128xbf16>, vector<128x128xbf16>, vector<128x128xf32> -> vector<128x128xf32>
    %c0_4 = arith.constant 0 : index
    %c0_5 = arith.constant 0 : index
    %c0_6 = arith.constant 0 : index
    %6 = vector.load %arg3[%c0_4, %c0_5, %c0_6] : memref<1x128x128xf32, #tpu.memory_space<vmem>>, vector<1x128x128xf32>
    %7 = vector.shape_cast %6 : vector<1x128x128xf32> to vector<128x128xf32>
    %cst_7 = arith.constant dense<0.000000e+00> : vector<128x128xf32>
    %8 = tpu.matmul %5, %7, %cst_7 {dimension_numbers = #tpu.dot_dimension_numbers<[1], [0], [0], [1], [0, 0, 1, 1], [], []>} : vector<128x128xf32>, vector<128x128xf32>, vector<128x128xf32> -> vector<128x128xf32>
    %c0_8 = arith.constant 0 : index
    %c0_9 = arith.constant 0 : index
    %c0_10 = arith.constant 0 : index
    %9 = vector.load %arg4[%c0_8, %c0_9, %c0_10] : memref<1x1x128xf32, #tpu.memory_space<vmem>>, vector<1x1x128xf32>
    %10 = vector.shape_cast %9 : vector<1x1x128xf32> to vector<1x128xf32>
    %11 = vector.broadcast %10 : vector<1x128xf32> to vector<128x128xf32>
    %12 = arith.addf %8, %11 : vector<128x128xf32>
    %cst_11 = arith.constant 0.000000e+00 : f32
    %13 = vector.broadcast %cst_11 : f32 to vector<128x128xf32>
    %14 = arith.maximumf %12, %13 : vector<128x128xf32>
    %c0_12 = arith.constant 0 : index
    %c0_13 = arith.constant 0 : index
    %c0_14 = arith.constant 0 : index
    %15 = vector.load %arg5[%c0_12, %c0_13, %c0_14] : memref<1x128x128xf32, #tpu.memory_space<vmem>>, vector<1x128x128xf32>
    %16 = vector.shape_cast %15 : vector<1x128x128xf32> to vector<128x128xf32>
    %cst_15 = arith.constant dense<0.000000e+00> : vector<128x128xf32>
    %17 = tpu.matmul %14, %16, %cst_15 {dimension_numbers = #tpu.dot_dimension_numbers<[1], [0], [0], [1], [0, 0, 1, 1], [], []>} : vector<128x128xf32>, vector<128x128xf32>, vector<128x128xf32> -> vector<128x128xf32>
    %c0_16 = arith.constant 0 : index
    %c0_17 = arith.constant 0 : index
    %c0_18 = arith.constant 0 : index
    %18 = vector.load %arg6[%c0_16, %c0_17, %c0_18] : memref<1x1x128xf32, #tpu.memory_space<vmem>>, vector<1x1x128xf32>
    %19 = vector.shape_cast %18 : vector<1x1x128xf32> to vector<1x128xf32>
    %20 = vector.broadcast %19 : vector<1x128xf32> to vector<128x128xf32>
    %21 = arith.addf %17, %20 : vector<128x128xf32>
    %22 = arith.truncf %21 : vector<128x128xf32> to vector<128x128xbf16>
    %c0_19 = arith.constant 0 : index
    %c0_20 = arith.constant 0 : index
    %23 = vector.load %arg8[%c0_19, %c0_20] : memref<128x128xbf16, #tpu.memory_space<vmem>>, vector<128x128xbf16>
    tpu.vector_store %arg8[%c0_19, %c0_20], %22 {strides = array<i32>} : memref<128x128xbf16, #tpu.memory_space<vmem>>, vector<128x128xbf16>,
    %c2_i32 = arith.constant 2 : i32
    %24 = arith.cmpi eq, %arg0, %c2_i32 : i32
    %25 = arith.extui %24 : i1 to i32
    %c0_i32_21 = arith.constant 0 : i32
    %26 = arith.cmpi ne, %25, %c0_i32_21 : i32
    scf.if %26 {
      %c0_22 = arith.constant 0 : index
      %c0_23 = arith.constant 0 : index
      %27 = vector.load %arg7[%c0_22, %c0_23] : memref<128x128xf32, #tpu.memory_space<vmem>>, vector<128x128xf32>
      tpu.vector_store %arg7[%c0_22, %c0_23], %21 {strides = array<i32>} : memref<128x128xf32, #tpu.memory_space<vmem>>, vector<128x128xf32>,
    } else {
    }
    return
  }
  func.func @transform_0(%arg0: i32) -> (i32, i32) {
    %c0_i32 = arith.constant 0 : i32
    %c0_i32_0 = arith.constant 0 : i32
    %c0_i32_1 = arith.constant 0 : i32
    return %c0_i32, %c0_i32_0 : i32, i32
  }
  func.func @transform_1(%arg0: i32) -> (i32, i32) {
    %c0_i32 = arith.constant 0 : i32
    %c0_i32_0 = arith.constant 0 : i32
    %c0_i32_1 = arith.constant 0 : i32
    return %c0_i32, %c0_i32_0 : i32, i32
  }
  func.func @transform_2(%arg0: i32) -> (i32, i32, i32) {
    %c0_i32 = arith.constant 0 : i32
    %c0_i32_0 = arith.constant 0 : i32
    %c0_i32_1 = arith.constant 0 : i32
    return %arg0, %c0_i32, %c0_i32_0 : i32, i32, i32
  }
  func.func @transform_3(%arg0: i32) -> (i32, i32, i32) {
    %c0_i32 = arith.constant 0 : i32
    %c0_i32_0 = arith.constant 0 : i32
    %c0_i32_1 = arith.constant 0 : i32
    return %arg0, %c0_i32, %c0_i32_0 : i32, i32, i32
  }
  func.func @transform_4(%arg0: i32) -> (i32, i32, i32) {
    %c0_i32 = arith.constant 0 : i32
    %c0_i32_0 = arith.constant 0 : i32
    %c0_i32_1 = arith.constant 0 : i32
    return %arg0, %c0_i32, %c0_i32_0 : i32, i32, i32
  }
  func.func @transform_5(%arg0: i32) -> (i32, i32, i32) {
    %c0_i32 = arith.constant 0 : i32
    %c0_i32_0 = arith.constant 0 : i32
    %c0_i32_1 = arith.constant 0 : i32
    return %arg0, %c0_i32, %c0_i32_0 : i32, i32, i32
  }
  func.func @transform_6(%arg0: i32) -> (i32, i32) {
    %c0_i32 = arith.constant 0 : i32
    %c0_i32_0 = arith.constant 0 : i32
    %c0_i32_1 = arith.constant 0 : i32
    return %c0_i32, %c0_i32_0 : i32, i32
  }
}

</mosaic_0001>

<llo_original>
// kernel: gin_forward.1
$region0: #{gin_forward.1}
  #allocation0 [shape = 'u32[]', space=smem, size = 0x4, offset = 0x4, fixed_abs, tag = 'smem constant byte address 0x4 - core index']
  #allocation1 [shape = 'u32[72,128]{1,0:T(1,128)}', space=vmem, size = 0x9000, scoped, tag = 'internal scratch']
  #allocation2 [shape = 'bf16[128,128]{1,0:T(8,128)(2,1)}', space=vmem, size = 0x8000, scoped, tag = 'scratch operand']
  %s0 = inlined_call_operand.vmem [shape: bf16[128,128], index: 0, kind: input, shape index: {}]
  %s1 = inlined_call_operand.vmem [shape: bf16[128,128], index: 1, kind: input, shape index: {}]
  %s2 = inlined_call_operand.vmem [shape: f32[3,128,128], index: 2, kind: input, shape index: {}]
  %s3 = inlined_call_operand.vmem [shape: f32[3,1,128], index: 3, kind: input, shape index: {}]
  %s4 = inlined_call_operand.vmem [shape: f32[3,128,128], index: 4, kind: input, shape index: {}]
  %s5 = inlined_call_operand.vmem [shape: f32[3,1,128], index: 5, kind: input, shape index: {}]
  %s6 = inlined_call_operand.vmem [shape: f32[128,128], index: 6, kind: output, shape index: {}]
  %s7 = sld [smem:[#allocation0]]
  $region65: #{gin_forward.1} parent=0
    _
  %s9 = ssub.s32 1, %s7
  %s10 = scalar_select 0, %s9, %s7
  loop: start=0, step=1, limit=5
  $region2: #{gin_forward.1} parent=0 // loop_pre_header
    _
  $region3: #{gin_forward.1} parent=0 // loop_header
    %s12 = sphi 0, %s16
    %p13 = scmp.ge.s32.totalorder %s12, 5
    %s20 = sphi 0, %s20
    %s22 = sphi 0, %s20
    %s23 = sphi 0, %s22
    %s37 = sphi 0, %s23
    %s41 = sphi 0, %s41
    %s43 = sphi 0, %s41
    %s44 = sphi 0, %s43
    %s58 = sphi 0, %s44
    %s64 = sphi 0, %s66
    %s67 = sphi 0, %s64
    %s68 = sphi 0, %s67
    %s84 = sphi 0, %s68
    %s90 = sphi 0, %s92
    %s93 = sphi 0, %s90
    %s94 = sphi 0, %s93
    %s110 = sphi 0, %s94
    %s116 = sphi 0, %s118
    %s119 = sphi 0, %s116
    %s120 = sphi 0, %s119
    %s136 = sphi 0, %s120
    %s142 = sphi 0, %s144
    %s145 = sphi 0, %s142
    %s146 = sphi 0, %s145
    %s162 = sphi 0, %s146
    %s166 = sphi 0, %s166
    %s168 = sphi 0, %s166
    %s169 = sphi 0, %s168
    %s183 = sphi 0, %s169
  $region4: #{gin_forward.1} parent=0 // loop_header_branch
    %15 = sbr.rel (%p13) target = $region8
  $region5: #{gin_forward.1} parent=0 // loop_body
    %s17 = ssub.s32 %s12, 1
    %s18 = ssub.s32 %s12, 2
    %s19 = sadd.s32 %s12, 1
    %s21 = sadd.s32 %s20, 1
    %p24 = scmp.eq.s32.totalorder %s12, 2
    %p25 = scmp.ne.s32.totalorder %s20, %s22
    %p26 = scmp.eq.s32.totalorder %s12, 0
    %p27 = por %p25, %p26
    %p28 = scmp.ne.s32.totalorder %s20, %s22
    %p29 = scmp.eq.s32.totalorder %s17, 2
    %p30 = por %p28, %p29
    %p31 = scmp.ne.s32.totalorder %s22, %s23
    %p32 = scmp.eq.s32.totalorder %s17, 0
    %p33 = por %p31, %p32
    %p34 = scmp.ne.s32.totalorder %s22, %s23
    %p35 = scmp.eq.s32.totalorder %s18, 2
    %p36 = por %p34, %p35
    %p38 = scmp.ne.s32.totalorder %s23, %s37
    %p39 = scmp.eq.s32.totalorder %s18, 0
    %p40 = por %p38, %p39
    %s42 = sadd.s32 %s41, 1
    %p45 = scmp.eq.s32.totalorder %s12, 2
    %p46 = scmp.ne.s32.totalorder %s41, %s43
    %p47 = scmp.eq.s32.totalorder %s12, 0
    %p48 = por %p46, %p47
    %p49 = scmp.ne.s32.totalorder %s41, %s43
    %p50 = scmp.eq.s32.totalorder %s17, 2
    %p51 = por %p49, %p50
    %p52 = scmp.ne.s32.totalorder %s43, %s44
    %p53 = scmp.eq.s32.totalorder %s17, 0
    %p54 = por %p52, %p53
    %p55 = scmp.ne.s32.totalorder %s43, %s44
    %p56 = scmp.eq.s32.totalorder %s18, 2
    %p57 = por %p55, %p56
    %p59 = scmp.ne.s32.totalorder %s44, %s58
    %p60 = scmp.eq.s32.totalorder %s18, 0
    %p61 = por %p59, %p60
    %s62 = ssub.s32 %s12, %s19
    %p63 = scmp.eq.s32.totalorder %s62, 0
    %s65 = sadd.s32 %s64, 1
    %s66 = scalar_select %p63, %s64, %s65
    %p69 = pneg %p63
    %p70 = scmp.eq.s32.totalorder %s12, 2
    %p71 = por %p69, %p70
    %p72 = scmp.ne.s32.totalorder %s64, %s67
    %p73 = scmp.eq.s32.totalorder %s12, 0
    %p74 = por %p72, %p73
    %p75 = scmp.ne.s32.totalorder %s64, %s67
    %p76 = scmp.eq.s32.totalorder %s17, 2
    %p77 = por %p75, %p76
    %p78 = scmp.ne.s32.totalorder %s67, %s68
    %p79 = scmp.eq.s32.totalorder %s17, 0
    %p80 = por %p78, %p79
    %p81 = scmp.ne.s32.totalorder %s67, %s68
    %p82 = scmp.eq.s32.totalorder %s18, 2
    %p83 = por %p81, %p82
    %p85 = scmp.ne.s32.totalorder %s68, %s84
    %p86 = scmp.eq.s32.totalorder %s18, 0
    %p87 = por %p85, %p86
    %s88 = ssub.s32 %s12, %s19
    %p89 = scmp.eq.s32.totalorder %s88, 0
    %s91 = sadd.s32 %s90, 1
    %s92 = scalar_select %p89, %s90, %s91
    %p95 = pneg %p89
    %p96 = scmp.eq.s32.totalorder %s12, 2
    %p97 = por %p95, %p96
    %p98 = scmp.ne.s32.totalorder %s90, %s93
    %p99 = scmp.eq.s32.totalorder %s12, 0
    %p100 = por %p98, %p99
    %p101 = scmp.ne.s32.totalorder %s90, %s93
    %p102 = scmp.eq.s32.totalorder %s17, 2
    %p103 = por %p101, %p102
    %p104 = scmp.ne.s32.totalorder %s93, %s94
    %p105 = scmp.eq.s32.totalorder %s17, 0
    %p106 = por %p104, %p105
    %p107 = scmp.ne.s32.totalorder %s93, %s94
    %p108 = scmp.eq.s32.totalorder %s18, 2
    %p109 = por %p107, %p108
    %p111 = scmp.ne.s32.totalorder %s94, %s110
    %p112 = scmp.eq.s32.totalorder %s18, 0
    %p113 = por %p111, %p112
    %s114 = ssub.s32 %s12, %s19
    %p115 = scmp.eq.s32.totalorder %s114, 0
    %s117 = sadd.s32 %s116, 1
    %s118 = scalar_select %p115, %s116, %s117
    %p121 = pneg %p115
    %p122 = scmp.eq.s32.totalorder %s12, 2
    %p123 = por %p121, %p122
    %p124 = scmp.ne.s32.totalorder %s116, %s119
    %p125 = scmp.eq.s32.totalorder %s12, 0
    %p126 = por %p124, %p125
    %p127 = scmp.ne.s32.totalorder %s116, %s119
    %p128 = scmp.eq.s32.totalorder %s17, 2
    %p129 = por %p127, %p128
    %p130 = scmp.ne.s32.totalorder %s119, %s120
    %p131 = scmp.eq.s32.totalorder %s17, 0
    %p132 = por %p130, %p131
    %p133 = scmp.ne.s32.totalorder %s119, %s120
    %p134 = scmp.eq.s32.totalorder %s18, 2
    %p135 = por %p133, %p134
    %p137 = scmp.ne.s32.totalorder %s120, %s136
    %p138 = scmp.eq.s32.totalorder %s18, 0
    %p139 = por %p137, %p138
    %s140 = ssub.s32 %s12, %s19
    %p141 = scmp.eq.s32.totalorder %s140, 0
    %s143 = sadd.s32 %s142, 1
    %s144 = scalar_select %p141, %s142, %s143
    %p147 = pneg %p141
    %p148 = scmp.eq.s32.totalorder %s12, 2
    %p149 = por %p147, %p148
    %p150 = scmp.ne.s32.totalorder %s142, %s145
    %p151 = scmp.eq.s32.totalorder %s12, 0
    %p152 = por %p150, %p151
    %p153 = scmp.ne.s32.totalorder %s142, %s145
    %p154 = scmp.eq.s32.totalorder %s17, 2
    %p155 = por %p153, %p154
    %p156 = scmp.ne.s32.totalorder %s145, %s146
    %p157 = scmp.eq.s32.totalorder %s17, 0
    %p158 = por %p156, %p157
    %p159 = scmp.ne.s32.totalorder %s145, %s146
    %p160 = scmp.eq.s32.totalorder %s18, 2
    %p161 = por %p159, %p160
    %p163 = scmp.ne.s32.totalorder %s146, %s162
    %p164 = scmp.eq.s32.totalorder %s18, 0
    %p165 = por %p163, %p164
    %s167 = sadd.s32 %s166, 1
    %p170 = scmp.eq.s32.totalorder %s12, 2
    %p171 = scmp.ne.s32.totalorder %s166, %s168
    %p172 = scmp.eq.s32.totalorder %s12, 0
    %p173 = por %p171, %p172
    %p174 = scmp.ne.s32.totalorder %s166, %s168
    %p175 = scmp.eq.s32.totalorder %s17, 2
    %p176 = por %p174, %p175
    %p177 = scmp.ne.s32.totalorder %s168, %s169
    %p178 = scmp.eq.s32.totalorder %s17, 0
    %p179 = por %p177, %p178
    %p180 = scmp.ne.s32.totalorder %s168, %s169
    %p181 = scmp.eq.s32.totalorder %s18, 2
    %p182 = por %p180, %p181
    %p184 = scmp.ne.s32.totalorder %s169, %s183
    %p185 = scmp.eq.s32.totalorder %s18, 0
    %p186 = por %p184, %p185
    %p187 = scmp.le.s32.totalorder 1, %s12
    %p188 = scmp.lt.s32.totalorder %s12, 4
    %p189 = pnand %p187, %p188
    %p190 = pneg %p189
    // Predicated region
    $region9: #{gin_forward.1} parent=5 // pred_check
      _
    $region10: #{gin_forward.1} parent=5 // pred_check_branch
      %192 = sbr.rel (%p189) target = $region12
    $region11: #{gin_forward.1} parent=5 // pred_region
      %s193 = ssub.s32 %s12, 1
      // Predicated region
      $region13: #{gin_forward.1} parent=11 // pred_check
        %p194 = pneg %p33
      $region14: #{gin_forward.1} parent=11 // pred_check_branch
        %196 = sbr.rel (%p194) target = $region16
      $region15: #{gin_forward.1} parent=11 // pred_region
        _
      $region16: #{gin_forward.1} parent=11 // pred_fallthru
        _
      // Predicated region
      $region17: #{gin_forward.1} parent=11 // pred_check
        %p197 = pneg %p54
      $region18: #{gin_forward.1} parent=11 // pred_check_branch
        %199 = sbr.rel (%p197) target = $region20
      $region19: #{gin_forward.1} parent=11 // pred_region
        _
      $region20: #{gin_forward.1} parent=11 // pred_fallthru
        _
    $region12: #{gin_forward.1} parent=5 // pred_fallthru
      _
    %p200 = scmp.lt.s32.totalorder %s12, 3
    // Predicated region
    $region21: #{gin_forward.1} parent=5 // pred_check
      %p201 = pneg %p200
    $region22: #{gin_forward.1} parent=5 // pred_check_branch
      %203 = sbr.rel (%p201) target = $region24
    $region23: #{gin_forward.1} parent=5 // pred_region
      // Predicated region
      $region25: #{gin_forward.1} parent=23 // pred_check
        %p204 = pneg %p74
      $region26: #{gin_forward.1} parent=23 // pred_check_branch
        %206 = sbr.rel (%p204) target = $region28
      $region27: #{gin_forward.1} parent=23 // pred_region
        %p207 = scmp.lt.s32.totalorder %s12, 2
        %s208 = scalar_select %p207, %s12, 2
        %s209 = smul.addr %s208, 16
        %s210 = smul.addr %s209, 8
        %s211 = scalar_lea.vmem %s2, %s210
      $region28: #{gin_forward.1} parent=23 // pred_fallthru
        _
      // Predicated region
      $region29: #{gin_forward.1} parent=23 // pred_check
        %p212 = pneg %p100
      $region30: #{gin_forward.1} parent=23 // pred_check_branch
        %214 = sbr.rel (%p212) target = $region32
      $region31: #{gin_forward.1} parent=23 // pred_region
        %p215 = scmp.lt.s32.totalorder %s12, 2
        %s216 = scalar_select %p215, %s12, 2
        %s217 = scalar_lea.vmem %s3, %s216
      $region32: #{gin_forward.1} parent=23 // pred_fallthru
        _
      // Predicated region
      $region33: #{gin_forward.1} parent=23 // pred_check
        %p218 = pneg %p126
      $region34: #{gin_forward.1} parent=23 // pred_check_branch
        %220 = sbr.rel (%p218) target = $region36
      $region35: #{gin_forward.1} parent=23 // pred_region
        %p221 = scmp.lt.s32.totalorder %s12, 2
        %s222 = scalar_select %p221, %s12, 2
        %s223 = smul.addr %s222, 16
        %s224 = smul.addr %s223, 8
        %s225 = scalar_lea.vmem %s4, %s224
      $region36: #{gin_forward.1} parent=23 // pred_fallthru
        _
      // Predicated region
      $region37: #{gin_forward.1} parent=23 // pred_check
        %p226 = pneg %p152
      $region38: #{gin_forward.1} parent=23 // pred_check_branch
        %228 = sbr.rel (%p226) target = $region40
      $region39: #{gin_forward.1} parent=23 // pred_region
        %p229 = scmp.lt.s32.totalorder %s12, 2
        %s230 = scalar_select %p229, %s12, 2
        %s231 = scalar_lea.vmem %s5, %s230
      $region40: #{gin_forward.1} parent=23 // pred_fallthru
        _
    $region24: #{gin_forward.1} parent=5 // pred_fallthru
      _
    %p232 = scmp.le.s32.totalorder 1, %s12
    %p233 = scmp.lt.s32.totalorder %s12, 4
    %p234 = pnand %p232, %p233
    %p235 = pneg %p234
    // Predicated region
    $region41: #{gin_forward.1} parent=5 // pred_check
      _
    $region42: #{gin_forward.1} parent=5 // pred_check_branch
      %237 = sbr.rel (%p234) target = $region44
    $region43: #{gin_forward.1} parent=5 // pred_region
      %s238 = ssub.s32 %s12, 1
      %p239 = pneg %p33
      %p240 = pneg %p30
      %p241 = pneg %p54
      %p242 = pneg %p51
      %p243 = scmp.lt.s32.totalorder %s17, 2
      %s244 = scalar_select %p243, %s17, 2
      %s245 = smul.addr %s244, 16
      %s246 = smul.addr %s245, 8
      %s247 = scalar_lea.vmem %s2, %s246
      %p248 = pneg %p80
      %p249 = pneg %p77
      %p250 = scmp.lt.s32.totalorder %s17, 2
      %s251 = scalar_select %p250, %s17, 2
      %s252 = scalar_lea.vmem %s3, %s251
      %p253 = pneg %p106
      %p254 = pneg %p103
      %p255 = scmp.lt.s32.totalorder %s17, 2
      %s256 = scalar_select %p255, %s17, 2
      %s257 = smul.addr %s256, 16
      %s258 = smul.addr %s257, 8
      %s259 = scalar_lea.vmem %s4, %s258
      %p260 = pneg %p132
      %p261 = pneg %p129
      %p262 = scmp.lt.s32.totalorder %s17, 2
      %s263 = scalar_select %p262, %s17, 2
      %s264 = scalar_lea.vmem %s5, %s263
      %p265 = pneg %p158
      %p266 = pneg %p155
      %p267 = pneg %p179
      %p268 = pneg %p176
      %p269 = scmp.lt.s32.totalorder %s17, 2
      %s270 = scalar_select %p269, %s17, 2
      %s271 = smul.addr %s270, 16
      %s272 = smul.addr %s271, 8
      %s273 = scalar_lea.vmem %s2, %s272
      %p274 = scmp.lt.s32.totalorder %s17, 2
      %s275 = scalar_select %p274, %s17, 2
      %s276 = scalar_lea.vmem %s3, %s275
      %p277 = scmp.lt.s32.totalorder %s17, 2
      %s278 = scalar_select %p277, %s17, 2
      %s279 = smul.addr %s278, 16
      %s280 = smul.addr %s279, 8
      %s281 = scalar_lea.vmem %s4, %s280
      %p282 = scmp.lt.s32.totalorder %s17, 2
      %s283 = scalar_select %p282, %s17, 2
      %s284 = scalar_lea.vmem %s5, %s283
      %p285 = scmp.eq.s32.totalorder %s17, 0
      // Predicated region
      $region45: #{gin_forward.1} parent=43 // pred_check
        %p286 = pneg %p285
      $region46: #{gin_forward.1} parent=43 // pred_check_branch
        %288 = sbr.rel (%p286) target = $region48
      $region47: #{gin_forward.1} parent=43 // pred_region
        %v289 = vld [vmem:[%s1] sm:$0xf]
        %v290 = vld [vmem:[%s1 + $0x4] sm:$0xf]
        %v291 = vld [vmem:[%s1 + $0x8] sm:$0xf]
        %v292 = vld [vmem:[%s1 + $0xc] sm:$0xf]
        %v293 = vld [vmem:[%s1 + $0x10] sm:$0xf]
        %v294 = vld [vmem:[%s1 + $0x14] sm:$0xf]
        %v295 = vld [vmem:[%s1 + $0x18] sm:$0xf]
        %v296 = vld [vmem:[%s1 + $0x1c] sm:$0xf]
        %v297 = vld [vmem:[%s1 + $0x20] sm:$0xf]
        %v298 = vld [vmem:[%s1 + $0x24] sm:$0xf]
        %v299 = vld [vmem:[%s1 + $0x28] sm:$0xf]
        %v300 = vld [vmem:[%s1 + $0x2c] sm:$0xf]
        %v301 = vld [vmem:[%s1 + $0x30] sm:$0xf]
        %v302 = vld [vmem:[%s1 + $0x34] sm:$0xf]
        %v303 = vld [vmem:[%s1 + $0x38] sm:$0xf]
        %v304 = vld [vmem:[%s1 + $0x3c] sm:$0xf]
        %305 = vst [vmem:[#allocation2] sm:$0xf] %v289
        %306 = vst [vmem:[#allocation2 + $0x4] sm:$0xf] %v290
        %307 = vst [vmem:[#allocation2 + $0x8] sm:$0xf] %v291
        %308 = vst [vmem:[#allocation2 + $0xc] sm:$0xf] %v292
        %309 = vst [vmem:[#allocation2 + $0x10] sm:$0xf] %v293
        %310 = vst [vmem:[#allocation2 + $0x14] sm:$0xf] %v294
        %311 = vst [vmem:[#allocation2 + $0x18] sm:$0xf] %v295
        %312 = vst [vmem:[#allocation2 + $0x1c] sm:$0xf] %v296
        %313 = vst [vmem:[#allocation2 + $0x20] sm:$0xf] %v297
        %314 = vst [vmem:[#allocation2 + $0x24] sm:$0xf] %v298
        %315 = vst [vmem:[#allocation2 + $0x28] sm:$0xf] %v299
        %316 = vst [vmem:[#allocation2 + $0x2c] sm:$0xf] %v300
        %317 = vst [vmem:[#allocation2 + $0x30] sm:$0xf] %v301
        %318 = vst [vmem:[#allocation2 + $0x34] sm:$0xf] %v302
        %319 = vst [vmem:[#allocation2 + $0x38] sm:$0xf] %v303
        %320 = vst [vmem:[#allocation2 + $0x3c] sm:$0xf] %v304
      $region48: #{gin_forward.1} parent=43 // pred_fallthru
        _
      %v321 = vld [vmem:[%s0] sm:$0xf]
      %v322 = vld [vmem:[%s0 + $0x4] sm:$0xf]
      %v323 = vld [vmem:[%s0 + $0x8] sm:$0xf]
      %v324 = vld [vmem:[%s0 + $0xc] sm:$0xf]
      %v325 = vld [vmem:[%s0 + $0x10] sm:$0xf]
      %v326 = vld [vmem:[%s0 + $0x14] sm:$0xf]
      %v327 = vld [vmem:[%s0 + $0x18] sm:$0xf]
      %v328 = vld [vmem:[%s0 + $0x1c] sm:$0xf]
      %v329 = vld [vmem:[%s0 + $0x20] sm:$0xf]
      %v330 = vld [vmem:[%s0 + $0x24] sm:$0xf]
      %v331 = vld [vmem:[%s0 + $0x28] sm:$0xf]
      %v332 = vld [vmem:[%s0 + $0x2c] sm:$0xf]
      %v333 = vld [vmem:[%s0 + $0x30] sm:$0xf]
      %v334 = vld [vmem:[%s0 + $0x34] sm:$0xf]
      %v335 = vld [vmem:[%s0 + $0x38] sm:$0xf]
      %v336 = vld [vmem:[%s0 + $0x3c] sm:$0xf]
      %v337 = vld [vmem:[#allocation2] sm:$0xf]
      %v338 = vld [vmem:[#allocation2 + $0x4] sm:$0xf]
      %v339 = vld [vmem:[#allocation2 + $0x8] sm:$0xf]
      %v340 = vld [vmem:[#allocation2 + $0xc] sm:$0xf]
      %v341 = vld [vmem:[#allocation2 + $0x10] sm:$0xf]
      %v342 = vld [vmem:[#allocation2 + $0x14] sm:$0xf]
      %v343 = vld [vmem:[#allocation2 + $0x18] sm:$0xf]
      %v344 = vld [vmem:[#allocation2 + $0x1c] sm:$0xf]
      %v345 = vld [vmem:[#allocation2 + $0x20] sm:$0xf]
      %v346 = vld [vmem:[#allocation2 + $0x24] sm:$0xf]
      %v347 = vld [vmem:[#allocation2 + $0x28] sm:$0xf]
      %v348 = vld [vmem:[#allocation2 + $0x2c] sm:$0xf]
      %v349 = vld [vmem:[#allocation2 + $0x30] sm:$0xf]
      %v350 = vld [vmem:[#allocation2 + $0x34] sm:$0xf]
      %v351 = vld [vmem:[#allocation2 + $0x38] sm:$0xf]
      %v352 = vld [vmem:[#allocation2 + $0x3c] sm:$0xf]
      %v369 = vunpack.c.l.b16 %v321
      %v370 = vunpack.c.l.b16 %v322
      %v371 = vunpack.c.l.b16 %v323
      %v372 = vunpack.c.l.b16 %v324
      %v373 = vunpack.c.l.b16 %v325
      %v374 = vunpack.c.l.b16 %v326
      %v375 = vunpack.c.l.b16 %v327
      %v376 = vunpack.c.l.b16 %v328
      %v377 = vunpack.c.l.b16 %v329
      %v378 = vunpack.c.l.b16 %v330
      %v379 = vunpack.c.l.b16 %v331
      %v380 = vunpack.c.l.b16 %v332
      %v381 = vunpack.c.l.b16 %v333
      %v382 = vunpack.c.l.b16 %v334
      %v383 = vunpack.c.l.b16 %v335
      %v384 = vunpack.c.l.b16 %v336
      %v385 = vpack.c.b16 %v370, %v369
      %v386 = vpack.c.b16 %v372, %v371
      %v387 = vpack.c.b16 %v374, %v373
      %v388 = vpack.c.b16 %v376, %v375
      %v389 = vpack.c.b16 %v378, %v377
      %v390 = vpack.c.b16 %v380, %v379
      %v391 = vpack.c.b16 %v382, %v381
      %v392 = vpack.c.b16 %v384, %v383
      %v417 = vunpack.c.l.b16 %v337
      %v418 = vunpack.c.l.b16 %v338
      %v419 = vunpack.c.l.b16 %v339
      %v420 = vunpack.c.l.b16 %v340
      %v421 = vunpack.c.l.b16 %v341
      %v422 = vunpack.c.l.b16 %v342
      %v423 = vunpack.c.l.b16 %v343
      %v424 = vunpack.c.l.b16 %v344
      %v425 = vunpack.c.l.b16 %v345
      %v426 = vunpack.c.l.b16 %v346
      %v427 = vunpack.c.l.b16 %v347
      %v428 = vunpack.c.l.b16 %v348
      %v429 = vunpack.c.l.b16 %v349
      %v430 = vunpack.c.l.b16 %v350
      %v431 = vunpack.c.l.b16 %v351
      %v432 = vunpack.c.l.b16 %v352
      %v433 = vpack.c.b16 %v418, %v417
      %v434 = vpack.c.b16 %v420, %v419
      %v435 = vpack.c.b16 %v422, %v421
      %v436 = vpack.c.b16 %v424, %v423
      %v437 = vpack.c.b16 %v426, %v425
      %v438 = vpack.c.b16 %v428, %v427
      %v439 = vpack.c.b16 %v430, %v429
      %v440 = vpack.c.b16 %v432, %v431
      %449 = vmatpush.bf16.msra.mxu0 %v440
      %450 = vmatpush.bf16.msra.mxu0 %v439
      %451 = vmatpush.bf16.msra.mxu0 %v438
      %452 = vmatpush.bf16.msra.mxu0 %v437
      %453 = vmatpush.bf16.msra.mxu0 %v436
      %454 = vmatpush.bf16.msra.mxu0 %v435
      %455 = vmatpush.bf16.msra.mxu0 %v434
      %456 = vmatpush.bf16.msra.mxu0 %v433
      %457 = vmatmul.bf16.gmra.mxu0 %v385
      %v458 = vpop.f32.mrf.mxu0
      %v459 = vadd.f32 0.0, %v458
      %v460 = vpop.f32.mrf.mxu0
      %v461 = vadd.f32 0.0, %v460
      %462 = vmatmul.bf16.gmra.mxu0 %v386
      %v463 = vpop.f32.mrf.mxu0
      %v464 = vadd.f32 0.0, %v463
      %v465 = vpop.f32.mrf.mxu0
      %v466 = vadd.f32 0.0, %v465
      %467 = vmatmul.bf16.gmra.mxu0 %v387
      %v468 = vpop.f32.mrf.mxu0
      %v469 = vadd.f32 0.0, %v468
      %v470 = vpop.f32.mrf.mxu0
      %v471 = vadd.f32 0.0, %v470
      %472 = vmatmul.bf16.gmra.mxu0 %v388
      %v473 = vpop.f32.mrf.mxu0
      %v474 = vadd.f32 0.0, %v473
      %v475 = vpop.f32.mrf.mxu0
      %v476 = vadd.f32 0.0, %v475
      %477 = vmatmul.bf16.gmra.mxu0 %v389
      %v478 = vpop.f32.mrf.mxu0
      %v479 = vadd.f32 0.0, %v478
      %v480 = vpop.f32.mrf.mxu0
      %v481 = vadd.f32 0.0, %v480
      %482 = vmatmul.bf16.gmra.mxu0 %v390
      %v483 = vpop.f32.mrf.mxu0
      %v484 = vadd.f32 0.0, %v483
      %v485 = vpop.f32.mrf.mxu0
      %v486 = vadd.f32 0.0, %v485
      %487 = vmatmul.bf16.gmra.mxu0 %v391
      %v488 = vpop.f32.mrf.mxu0
      %v489 = vadd.f32 0.0, %v488
      %v490 = vpop.f32.mrf.mxu0
      %v491 = vadd.f32 0.0, %v490
      %492 = vmatmul.bf16.gmra.mxu0 %v392
      %v493 = vpop.f32.mrf.mxu0
      %v494 = vadd.f32 0.0, %v493
      %v495 = vpop.f32.mrf.mxu0
      %v496 = vadd.f32 0.0, %v495
      %497 = vdwg.mxu0
      %v498 = vld [vmem:[%s273] sm:$0xff]
      %v499 = vld [vmem:[%s273 + $0x8] sm:$0xff]
      %v500 = vld [vmem:[%s273 + $0x10] sm:$0xff]
      %v501 = vld [vmem:[%s273 + $0x18] sm:$0xff]
      %v502 = vld [vmem:[%s273 + $0x20] sm:$0xff]
      %v503 = vld [vmem:[%s273 + $0x28] sm:$0xff]
      %v504 = vld [vmem:[%s273 + $0x30] sm:$0xff]
      %v505 = vld [vmem:[%s273 + $0x38] sm:$0xff]
      %v506 = vld [vmem:[%s273 + $0x40] sm:$0xff]
      %v507 = vld [vmem:[%s273 + $0x48] sm:$0xff]
      %v508 = vld [vmem:[%s273 + $0x50] sm:$0xff]
      %v509 = vld [vmem:[%s273 + $0x58] sm:$0xff]
      %v510 = vld [vmem:[%s273 + $0x60] sm:$0xff]
      %v511 = vld [vmem:[%s273 + $0x68] sm:$0xff]
      %v512 = vld [vmem:[%s273 + $0x70] sm:$0xff]
      %v513 = vld [vmem:[%s273 + $0x78] sm:$0xff]
      %v514 = vld [vmem:[%s276] sm:$0x1]
      %v516 = vperm.slane %v514, 0
      %518 = vmatpush.msra.mxu0 %v513
      %519 = vmatpush.msra.mxu0 %v512
      %520 = vmatpush.msra.mxu0 %v511
      %521 = vmatpush.msra.mxu0 %v510
      %522 = vmatpush.msra.mxu0 %v509
      %523 = vmatpush.msra.mxu0 %v508
      %524 = vmatpush.msra.mxu0 %v507
      %525 = vmatpush.msra.mxu0 %v506
      %526 = vmatpush.msra.mxu0 %v505
      %527 = vmatpush.msra.mxu0 %v504
      %528 = vmatpush.msra.mxu0 %v503
      %529 = vmatpush.msra.mxu0 %v502
      %530 = vmatpush.msra.mxu0 %v501
      %531 = vmatpush.msra.mxu0 %v500
      %532 = vmatpush.msra.mxu0 %v499
      %533 = vmatpush.msra.mxu0 %v498
      %534 = vmatmul.f32.gmra.mxu0 %v459
      %v535 = vpop.f32.mrf.mxu0
      %v536 = vadd.f32 %v516, %v535
      %537 = vmatmul.f32.gmra.mxu0 %v461
      %v538 = vpop.f32.mrf.mxu0
      %v539 = vadd.f32 %v516, %v538
      %540 = vmatmul.f32.gmra.mxu0 %v464
      %v541 = vpop.f32.mrf.mxu0
      %v542 = vadd.f32 %v516, %v541
      %543 = vmatmul.f32.gmra.mxu0 %v466
      %v544 = vpop.f32.mrf.mxu0
      %v545 = vadd.f32 %v516, %v544
      %546 = vmatmul.f32.gmra.mxu0 %v469
      %v547 = vpop.f32.mrf.mxu0
      %v548 = vadd.f32 %v516, %v547
      %549 = vmatmul.f32.gmra.mxu0 %v471
      %v550 = vpop.f32.mrf.mxu0
      %v551 = vadd.f32 %v516, %v550
      %552 = vmatmul.f32.gmra.mxu0 %v474
      %v553 = vpop.f32.mrf.mxu0
      %v554 = vadd.f32 %v516, %v553
      %555 = vmatmul.f32.gmra.mxu0 %v476
      %v556 = vpop.f32.mrf.mxu0
      %v557 = vadd.f32 %v516, %v556
      %558 = vmatmul.f32.gmra.mxu0 %v479
      %v559 = vpop.f32.mrf.mxu0
      %v560 = vadd.f32 %v516, %v559
      %561 = vmatmul.f32.gmra.mxu0 %v481
      %v562 = vpop.f32.mrf.mxu0
      %v563 = vadd.f32 %v516, %v562
      %564 = vmatmul.f32.gmra.mxu0 %v484
      %v565 = vpop.f32.mrf.mxu0
      %v566 = vadd.f32 %v516, %v565
      %567 = vmatmul.f32.gmra.mxu0 %v486
      %v568 = vpop.f32.mrf.mxu0
      %v569 = vadd.f32 %v516, %v568
      %570 = vmatmul.f32.gmra.mxu0 %v489
      %v571 = vpop.f32.mrf.mxu0
      %v572 = vadd.f32 %v516, %v571
      %573 = vmatmul.f32.gmra.mxu0 %v491
      %v574 = vpop.f32.mrf.mxu0
      %v575 = vadd.f32 %v516, %v574
      %576 = vmatmul.f32.gmra.mxu0 %v494
      %v577 = vpop.f32.mrf.mxu0
      %v578 = vadd.f32 %v516, %v577
      %579 = vmatmul.f32.gmra.mxu0 %v496
      %v580 = vpop.f32.mrf.mxu0
      %v581 = vadd.f32 %v516, %v580
      %582 = vdwg.mxu0
      %v583 = vmax.f32 %v536, 0.0
      %v584 = vmax.f32 %v539, 0.0
      %v585 = vmax.f32 %v542, 0.0
      %v586 = vmax.f32 %v545, 0.0
      %v587 = vmax.f32 %v548, 0.0
      %v588 = vmax.f32 %v551, 0.0
      %v589 = vmax.f32 %v554, 0.0
      %v590 = vmax.f32 %v557, 0.0
      %v591 = vmax.f32 %v560, 0.0
      %v592 = vmax.f32 %v563, 0.0
      %v593 = vmax.f32 %v566, 0.0
      %v594 = vmax.f32 %v569, 0.0
      %v595 = vmax.f32 %v572, 0.0
      %v596 = vmax.f32 %v575, 0.0
      %v597 = vmax.f32 %v578, 0.0
      %v598 = vmax.f32 %v581, 0.0
      %v599 = vld [vmem:[%s281] sm:$0xff]
      %v600 = vld [vmem:[%s281 + $0x8] sm:$0xff]
      %v601 = vld [vmem:[%s281 + $0x10] sm:$0xff]
      %v602 = vld [vmem:[%s281 + $0x18] sm:$0xff]
      %v603 = vld [vmem:[%s281 + $0x20] sm:$0xff]
      %v604 = vld [vmem:[%s281 + $0x28] sm:$0xff]
      %v605 = vld [vmem:[%s281 + $0x30] sm:$0xff]
      %v606 = vld [vmem:[%s281 + $0x38] sm:$0xff]
      %v607 = vld [vmem:[%s281 + $0x40] sm:$0xff]
      %v608 = vld [vmem:[%s281 + $0x48] sm:$0xff]
      %v609 = vld [vmem:[%s281 + $0x50] sm:$0xff]
      %v610 = vld [vmem:[%s281 + $0x58] sm:$0xff]
      %v611 = vld [vmem:[%s281 + $0x60] sm:$0xff]
      %v612 = vld [vmem:[%s281 + $0x68] sm:$0xff]
      %v613 = vld [vmem:[%s281 + $0x70] sm:$0xff]
      %v614 = vld [vmem:[%s281 + $0x78] sm:$0xff]
      %v615 = vld [vmem:[%s284] sm:$0x1]
      %v617 = vperm.slane %v615, 0
      %619 = vmatpush.msra.mxu0 %v614
      %620 = vmatpush.msra.mxu0 %v613
      %621 = vmatpush.msra.mxu0 %v612
      %622 = vmatpush.msra.mxu0 %v611
      %623 = vmatpush.msra.mxu0 %v610
      %624 = vmatpush.msra.mxu0 %v609
      %625 = vmatpush.msra.mxu0 %v608
      %626 = vmatpush.msra.mxu0 %v607
      %627 = vmatpush.msra.mxu0 %v606
      %628 = vmatpush.msra.mxu0 %v605
      %629 = vmatpush.msra.mxu0 %v604
      %630 = vmatpush.msra.mxu0 %v603
      %631 = vmatpush.msra.mxu0 %v602
      %632 = vmatpush.msra.mxu0 %v601
      %633 = vmatpush.msra.mxu0 %v600
      %634 = vmatpush.msra.mxu0 %v599
      %635 = vmatmul.f32.gmra.mxu0 %v583
      %v636 = vpop.f32.mrf.mxu0
      %v637 = vadd.f32 %v617, %v636
      %638 = vmatmul.f32.gmra.mxu0 %v584
      %v639 = vpop.f32.mrf.mxu0
      %v640 = vadd.f32 %v617, %v639
      %641 = vmatmul.f32.gmra.mxu0 %v585
      %v642 = vpop.f32.mrf.mxu0
      %v643 = vadd.f32 %v617, %v642
      %644 = vmatmul.f32.gmra.mxu0 %v586
      %v645 = vpop.f32.mrf.mxu0
      %v646 = vadd.f32 %v617, %v645
      %647 = vmatmul.f32.gmra.mxu0 %v587
      %v648 = vpop.f32.mrf.mxu0
      %v649 = vadd.f32 %v617, %v648
      %650 = vmatmul.f32.gmra.mxu0 %v588
      %v651 = vpop.f32.mrf.mxu0
      %v652 = vadd.f32 %v617, %v651
      %653 = vmatmul.f32.gmra.mxu0 %v589
      %v654 = vpop.f32.mrf.mxu0
      %v655 = vadd.f32 %v617, %v654
      %656 = vmatmul.f32.gmra.mxu0 %v590
      %v657 = vpop.f32.mrf.mxu0
      %v658 = vadd.f32 %v617, %v657
      %659 = vmatmul.f32.gmra.mxu0 %v591
      %v660 = vpop.f32.mrf.mxu0
      %v661 = vadd.f32 %v617, %v660
      %662 = vmatmul.f32.gmra.mxu0 %v592
      %v663 = vpop.f32.mrf.mxu0
      %v664 = vadd.f32 %v617, %v663
      %665 = vmatmul.f32.gmra.mxu0 %v593
      %v666 = vpop.f32.mrf.mxu0
      %v667 = vadd.f32 %v617, %v666
      %668 = vmatmul.f32.gmra.mxu0 %v594
      %v669 = vpop.f32.mrf.mxu0
      %v670 = vadd.f32 %v617, %v669
      %671 = vmatmul.f32.gmra.mxu0 %v595
      %v672 = vpop.f32.mrf.mxu0
      %v673 = vadd.f32 %v617, %v672
      %674 = vmatmul.f32.gmra.mxu0 %v596
      %v675 = vpop.f32.mrf.mxu0
      %v676 = vadd.f32 %v617, %v675
      %677 = vmatmul.f32.gmra.mxu0 %v597
      %v678 = vpop.f32.mrf.mxu0
      %v679 = vadd.f32 %v617, %v678
      %680 = vmatmul.f32.gmra.mxu0 %v598
      %v681 = vpop.f32.mrf.mxu0
      %v682 = vadd.f32 %v617, %v681
      %683 = vdwg.mxu0
      %v684 = vpack.c.bf16 %v637, %v637
      %v685 = vpack.c.bf16 %v640, %v640
      %v686 = vpack.c.bf16 %v643, %v643
      %v687 = vpack.c.bf16 %v646, %v646
      %v688 = vpack.c.bf16 %v649, %v649
      %v689 = vpack.c.bf16 %v652, %v652
      %v690 = vpack.c.bf16 %v655, %v655
      %v691 = vpack.c.bf16 %v658, %v658
      %v692 = vpack.c.bf16 %v661, %v661
      %v693 = vpack.c.bf16 %v664, %v664
      %v694 = vpack.c.bf16 %v667, %v667
      %v695 = vpack.c.bf16 %v670, %v670
      %v696 = vpack.c.bf16 %v673, %v673
      %v697 = vpack.c.bf16 %v676, %v676
      %v698 = vpack.c.bf16 %v679, %v679
      %v699 = vpack.c.bf16 %v682, %v682
      %700 = vst [vmem:[#allocation2] sm:$0xf] %v684
      %701 = vst [vmem:[#allocation2 + $0x4] sm:$0xf] %v685
      %702 = vst [vmem:[#allocation2 + $0x8] sm:$0xf] %v686
      %703 = vst [vmem:[#allocation2 + $0xc] sm:$0xf] %v687
      %704 = vst [vmem:[#allocation2 + $0x10] sm:$0xf] %v688
      %705 = vst [vmem:[#allocation2 + $0x14] sm:$0xf] %v689
      %706 = vst [vmem:[#allocation2 + $0x18] sm:$0xf] %v690
      %707 = vst [vmem:[#allocation2 + $0x1c] sm:$0xf] %v691
      %708 = vst [vmem:[#allocation2 + $0x20] sm:$0xf] %v692
      %709 = vst [vmem:[#allocation2 + $0x24] sm:$0xf] %v693
      %710 = vst [vmem:[#allocation2 + $0x28] sm:$0xf] %v694
      %711 = vst [vmem:[#allocation2 + $0x2c] sm:$0xf] %v695
      %712 = vst [vmem:[#allocation2 + $0x30] sm:$0xf] %v696
      %713 = vst [vmem:[#allocation2 + $0x34] sm:$0xf] %v697
      %714 = vst [vmem:[#allocation2 + $0x38] sm:$0xf] %v698
      %715 = vst [vmem:[#allocation2 + $0x3c] sm:$0xf] %v699
      %p716 = scmp.eq.s32.totalorder %s17, 2
      // Predicated region
      $region49: #{gin_forward.1} parent=43 // pred_check
        %p717 = pneg %p716
      $region50: #{gin_forward.1} parent=43 // pred_check_branch
        %719 = sbr.rel (%p717) target = $region52
      $region51: #{gin_forward.1} parent=43 // pred_region
        %720 = vst [vmem:[%s6] sm:$0xff] %v637
        %721 = vst [vmem:[%s6 + $0x8] sm:$0xff] %v640
        %722 = vst [vmem:[%s6 + $0x10] sm:$0xff] %v643
        %723 = vst [vmem:[%s6 + $0x18] sm:$0xff] %v646
        %724 = vst [vmem:[%s6 + $0x20] sm:$0xff] %v649
        %725 = vst [vmem:[%s6 + $0x28] sm:$0xff] %v652
        %726 = vst [vmem:[%s6 + $0x30] sm:$0xff] %v655
        %727 = vst [vmem:[%s6 + $0x38] sm:$0xff] %v658
        %728 = vst [vmem:[%s6 + $0x40] sm:$0xff] %v661
        %729 = vst [vmem:[%s6 + $0x48] sm:$0xff] %v664
        %730 = vst [vmem:[%s6 + $0x50] sm:$0xff] %v667
        %731 = vst [vmem:[%s6 + $0x58] sm:$0xff] %v670
        %732 = vst [vmem:[%s6 + $0x60] sm:$0xff] %v673
        %733 = vst [vmem:[%s6 + $0x68] sm:$0xff] %v676
        %734 = vst [vmem:[%s6 + $0x70] sm:$0xff] %v679
        %735 = vst [vmem:[%s6 + $0x78] sm:$0xff] %v682
      $region52: #{gin_forward.1} parent=43 // pred_fallthru
        _
      // Predicated region
      $region53: #{gin_forward.1} parent=43 // pred_check
        %p736 = pneg %p176
      $region54: #{gin_forward.1} parent=43 // pred_check_branch
        %738 = sbr.rel (%p736) target = $region56
      $region55: #{gin_forward.1} parent=43 // pred_region
        _
      $region56: #{gin_forward.1} parent=43 // pred_fallthru
        _
      // Predicated region
      $region57: #{gin_forward.1} parent=43 // pred_check
        %p739 = pneg %p176
      $region58: #{gin_forward.1} parent=43 // pred_check_branch
        %741 = sbr.rel (%p739) target = $region60
      $region59: #{gin_forward.1} parent=43 // pred_region
        _
      $region60: #{gin_forward.1} parent=43 // pred_fallthru
        _
    $region44: #{gin_forward.1} parent=5 // pred_fallthru
      _
    %p742 = scmp.le.s32.totalorder 2, %s12
    // Predicated region
    $region61: #{gin_forward.1} parent=5 // pred_check
      %p743 = pneg %p742
    $region62: #{gin_forward.1} parent=5 // pred_check_branch
      %745 = sbr.rel (%p743) target = $region64
    $region63: #{gin_forward.1} parent=5 // pred_region
      %s746 = ssub.s32 %s12, 2
    $region64: #{gin_forward.1} parent=5 // pred_fallthru
      _
  $region6: #{gin_forward.1} parent=0 // loop_footer
    %s16 = sadd.s32 1, %s12
  $region7: #{gin_forward.1} parent=0 // loop_footer_branch
    %11 = sbr.rel target = $region3
  $region8: #{gin_forward.1} parent=0 // loop_exit
    _

</llo_original>
